<compile_context>
chip_gen: v7x
topology: tpu7x:2x2x1
jax: 0.10.0
libtpu: 0.0.40
codegen_flags: <defaults>
</compile_context>

<pallas_src>
import functools

import jax
import jax.numpy as jnp
from jax.experimental import pallas as pl
from jax.experimental.pallas import tpu as pltpu

_EPS = 1e-6


def _rle_kernel(pred_ref, target_ref, sigma_ref, pair_ref, out_ref, *,
                n_rows, tile_rows, ragged):
    """One grid step: partial sum of the RLE negative log-likelihood.

    pred_ref/target_ref : (TB, 2L) native dtype, lanes interleaved x0 y0 x1 y1 ...
    sigma_ref           : (TB, L)  native dtype
    pair_ref            : (2L, L)  f32 constant, pair[c, j] = 1 iff c // 2 == j
    out_ref             : (1, 8, 128) f32 — this block's partial sum (broadcast)
    """
    i = pl.program_id(0)

    def partial_sum(mask_rows):
        p = pred_ref[...].astype(jnp.float32)
        t = target_ref[...].astype(jnp.float32)
        s = sigma_ref[...].astype(jnp.float32)

        d = p - t
        d2 = d * d
        # De-interleave + pair-sum on the MXU: r2[b, j] = dx^2 + dy^2.
        r2 = jnp.dot(d2, pair_ref[...],
                     preferred_element_type=jnp.float32,
                     precision=jax.lax.Precision.HIGHEST)
        residual = jnp.sqrt(r2)
        sig = s + jnp.float32(_EPS)

        if mask_rows:
            row = jax.lax.broadcasted_iota(jnp.int32, sig.shape, 0) + i * tile_rows
            valid = row < n_rows
            # Neutralize padded rows BEFORE log/div so garbage never propagates.
            sig = jnp.where(valid, sig, jnp.float32(1.0))
            residual = jnp.where(valid, residual, jnp.float32(0.0))

        nll = jnp.log(sig) + residual / sig
        return jnp.sum(nll)

    def write(val):
        out_ref[...] = jnp.full(out_ref.shape, val, dtype=jnp.float32)

    if not ragged:
        write(partial_sum(False))
    else:
        last = pl.num_programs(0) - 1

        @pl.when(i < last)
        def _full_block():
            write(partial_sum(False))

        @pl.when(i == last)
        def _last_block():
            write(partial_sum(True))


@jax.jit
def residual_log_likelihood_loss(pred_2d, target_2d, sigma):
    """pred_2d, target_2d: [B, J, 2]; sigma: [B, J]  ->  scalar f32 loss."""
    B, J, two = pred_2d.shape
    assert two == 2 and target_2d.shape == pred_2d.shape and sigma.shape == (B, J)

    # --- Lane folding: pack k batch rows into the lane axis (free row-major
    #     reshape, no HBM pass) so the working lane width k*J fills 128+ lanes.
    k = 1
    while (B % (k * 2) == 0) and ((k * 2) * J <= 512):
        k *= 2
    rows = B // k
    lanes = k * J

    pred = pred_2d.reshape(rows, 2 * lanes)      # native dtype, free reshape
    target = target_2d.reshape(rows, 2 * lanes)
    sig = sigma.reshape(rows, lanes)

    # Constant pairing matrix (hoisted out of the kernel loop, resident in VMEM).
    cols = jnp.arange(2 * lanes, dtype=jnp.int32)
    outs = jnp.arange(lanes, dtype=jnp.int32)
    pair = ((cols[:, None] // 2) == outs[None, :]).astype(jnp.float32)

    # --- Batch-tile sizing from a portable VMEM budget (safe on v5e/v6e/v7x).
    it_pt = pred_2d.dtype.itemsize
    it_s = sigma.dtype.itemsize
    per_row_inputs = 2 * (2 * (2 * lanes) * it_pt + lanes * it_s)   # double-buffered
    per_row_temps = (2 * lanes) * 4 * 3 + lanes * 4 * 4             # f32 intermediates
    budget = 20 << 20
    tile_cap = max(32, budget // (per_row_inputs + per_row_temps))
    tile_cap = min(tile_cap, 8192)
    if rows <= tile_cap:
        tile_rows = rows                 # full extent (always legal)
    else:
        tile_rows = (tile_cap // 32) * 32  # sublane / bf16-packing friendly

    num_tiles = pl.cdiv(rows, tile_rows)
    ragged = (rows % tile_rows) != 0

    pair_bytes = 2 * (2 * lanes) * lanes * 4
    footprint = (tile_rows * (per_row_inputs + per_row_temps)
                 + pair_bytes + 2 * 8 * 128 * 4)
    vmem_limit = int(min(48 << 20, max(16 << 20, footprint + (4 << 20))))

    kernel = functools.partial(
        _rle_kernel, n_rows=rows, tile_rows=tile_rows, ragged=ragged)

    partials = pl.pallas_call(
        kernel,
        out_shape=jax.ShapeDtypeStruct((num_tiles, 8, 128), jnp.float32),
        grid=(num_tiles,),
        in_specs=[
            pl.BlockSpec((tile_rows, 2 * lanes), lambda i: (i, 0)),
            pl.BlockSpec((tile_rows, 2 * lanes), lambda i: (i, 0)),
            pl.BlockSpec((tile_rows, lanes), lambda i: (i, 0)),
            pl.BlockSpec((2 * lanes, lanes), lambda i: (0, 0)),   # resident constant
        ],
        out_specs=pl.BlockSpec((1, 8, 128), lambda i: (i, 0, 0)),
        compiler_params=pltpu.CompilerParams(
            dimension_semantics=("parallel",),   # independent per-block partials
            vmem_limit_bytes=vmem_limit,
        ),
    )(pred, target, sig, pair)

    # Tiny finalize in XLA: sum per-block partials and apply the mean scale.
    total = jnp.sum(partials[:, 0, 0])
    return total * jnp.float32(1.0 / (B * J))


def _reference(pred_2d, target_2d, sigma):
    eps = 1e-6
    residual = jnp.linalg.norm(pred_2d.astype(jnp.float32)
                               - target_2d.astype(jnp.float32), axis=-1)
    s = sigma.astype(jnp.float32) + eps
    return jnp.mean(jnp.log(s) + residual / s)


if __name__ == "__main__":
    key = jax.random.PRNGKey(0)

    # Primary small case consistent with the module (batch=2, joints=16).
    cases = [(2, 16), (7, 17), (512, 16)]
    for idx, (B, J) in enumerate(cases):
        k1, k2, k3 = jax.random.split(jax.random.fold_in(key, idx), 3)
        pred_2d = jax.random.normal(k1, (B, J, 2), dtype=jnp.float32)
        target_2d = jax.random.normal(k2, (B, J, 2), dtype=jnp.float32)
        sigma = jax.random.uniform(k3, (B, J), dtype=jnp.float32,
                                   minval=0.1, maxval=1.0)

        loss = residual_log_likelihood_loss(pred_2d, target_2d, sigma)
        jax.block_until_ready(loss)

        ref = _reference(pred_2d, target_2d, sigma)
        assert jnp.allclose(loss, ref, rtol=1e-4, atol=1e-4), (B, J, loss, ref)

    print("KERNEL_OK")
</pallas_src>

<mosaic_0001>
module attributes {stable_mosaic.version = 11 : i64} {
  func.func @_rle_kernel(%arg0: i32, %arg1: memref<1x64xf32, #tpu.memory_space<vmem>>, %arg2: memref<1x64xf32, #tpu.memory_space<vmem>>, %arg3: memref<1x32xf32, #tpu.memory_space<vmem>>, %arg4: memref<64x32xf32, #tpu.memory_space<vmem>>, %arg5: memref<1x8x128xf32, #tpu.memory_space<vmem>>) attributes {dimension_semantics = [#tpu.dimension_semantics<parallel>], iteration_bounds = array<i64: 1>, scalar_prefetch = 0 : i64, scratch_operands = 0 : i64, tpu.core_type = #tpu.core_type<tc>, window_params = [{transform_indices = @transform_0, window_bounds = array<i64: 1, 64>}, {transform_indices = @transform_1, window_bounds = array<i64: 1, 64>}, {transform_indices = @transform_2, window_bounds = array<i64: 1, 32>}, {pipeline_mode = #tpu.pipeline_mode<synchronous>, transform_indices = @transform_3, window_bounds = array<i64: 64, 32>}, {transform_indices = @transform_4, window_bounds = array<i64: 1, 8, 128>}]} {
    %c0 = arith.constant 0 : index
    %c0_0 = arith.constant 0 : index
    %0 = vector.load %arg1[%c0, %c0_0] : memref<1x64xf32, #tpu.memory_space<vmem>>, vector<1x64xf32>
    %c0_1 = arith.constant 0 : index
    %c0_2 = arith.constant 0 : index
    %1 = vector.load %arg2[%c0_1, %c0_2] : memref<1x64xf32, #tpu.memory_space<vmem>>, vector<1x64xf32>
    %c0_3 = arith.constant 0 : index
    %c0_4 = arith.constant 0 : index
    %2 = vector.load %arg3[%c0_3, %c0_4] : memref<1x32xf32, #tpu.memory_space<vmem>>, vector<1x32xf32>
    %3 = arith.subf %0, %1 : vector<1x64xf32>
    %4 = arith.mulf %3, %3 : vector<1x64xf32>
    %c0_5 = arith.constant 0 : index
    %c0_6 = arith.constant 0 : index
    %5 = vector.load %arg4[%c0_5, %c0_6] : memref<64x32xf32, #tpu.memory_space<vmem>>, vector<64x32xf32>
    %cst = arith.constant dense<0.000000e+00> : vector<1x32xf32>
    %6 = tpu.matmul %4, %5, %cst {dimension_numbers = #tpu.dot_dimension_numbers<[1], [0], [0], [1], [0, 0, 1, 1], [], []>, precision = #tpu.contract_precision<fp32>} : vector<1x64xf32>, vector<64x32xf32>, vector<1x32xf32> -> vector<1x32xf32>
    %7 = math.sqrt %6 : vector<1x32xf32>
    %cst_7 = arith.constant 9.99999997E-7 : f32
    %8 = vector.broadcast %cst_7 : f32 to vector<1x32xf32>
    %9 = arith.addf %2, %8 : vector<1x32xf32>
    %10 = math.log %9 : vector<1x32xf32>
    %11 = arith.divf %7, %9 : vector<1x32xf32>
    %12 = arith.addf %10, %11 : vector<1x32xf32>
    %13 = vector.shape_cast %12 : vector<1x32xf32> to vector<1x1x32xf32>
    %cst_8 = arith.constant dense<0.000000e+00> : vector<1xf32>
    %14 = vector.multi_reduction <add>, %13, %cst_8 [1, 2] : vector<1x1x32xf32> to vector<1xf32>
    %15 = vector.shape_cast %14 : vector<1xf32> to vector<1x1x1xf32>
    %16 = vector.extract %15[0, 0, 0] : f32 from vector<1x1x1xf32>
    %17 = vector.broadcast %16 : f32 to vector<1x8x128xf32>
    %c0_9 = arith.constant 0 : index
    %c0_10 = arith.constant 0 : index
    %c0_11 = arith.constant 0 : index
    %18 = vector.load %arg5[%c0_9, %c0_10, %c0_11] : memref<1x8x128xf32, #tpu.memory_space<vmem>>, vector<1x8x128xf32>
    tpu.vector_store %arg5[%c0_9, %c0_10, %c0_11], %17 {strides = array<i32>} : memref<1x8x128xf32, #tpu.memory_space<vmem>>, vector<1x8x128xf32>,
    return
  }
  func.func @transform_0(%arg0: i32) -> (i32, i32) {
    %c0_i32 = arith.constant 0 : i32
    %c0_i32_0 = arith.constant 0 : i32
    return %arg0, %c0_i32 : i32, i32
  }
  func.func @transform_1(%arg0: i32) -> (i32, i32) {
    %c0_i32 = arith.constant 0 : i32
    %c0_i32_0 = arith.constant 0 : i32
    return %arg0, %c0_i32 : i32, i32
  }
  func.func @transform_2(%arg0: i32) -> (i32, i32) {
    %c0_i32 = arith.constant 0 : i32
    %c0_i32_0 = arith.constant 0 : i32
    return %arg0, %c0_i32 : i32, i32
  }
  func.func @transform_3(%arg0: i32) -> (i32, i32) {
    %c0_i32 = arith.constant 0 : i32
    %c0_i32_0 = arith.constant 0 : i32
    %c0_i32_1 = arith.constant 0 : i32
    return %c0_i32, %c0_i32_0 : i32, i32
  }
  func.func @transform_4(%arg0: i32) -> (i32, i32, i32) {
    %c0_i32 = arith.constant 0 : i32
    %c0_i32_0 = arith.constant 0 : i32
    %c0_i32_1 = arith.constant 0 : i32
    return %arg0, %c0_i32, %c0_i32_0 : i32, i32, i32
  }
}

</mosaic_0001>

<llo_original>
// kernel: residual_log_likelihood_loss.1
$region0: #{residual_log_likelihood_loss.1}
  #allocation0 [shape = 'u32[]', space=smem, size = 0x4, offset = 0x4, fixed_abs, tag = 'smem constant byte address 0x4 - core index']
  #allocation1 [shape = 'u32[144,128]{1,0:T(1,128)}', space=vmem, size = 0x12000, scoped, tag = 'internal scratch']
  %s0 = inlined_call_operand.vmem [shape: f32[1,64], index: 0, kind: input, shape index: {}]
  %s1 = inlined_call_operand.vmem [shape: f32[1,64], index: 1, kind: input, shape index: {}]
  %s2 = inlined_call_operand.vmem [shape: f32[1,32], index: 2, kind: input, shape index: {}]
  %s3 = inlined_call_operand.vmem [shape: f32[64,32], index: 3, kind: input, shape index: {}]
  %s4 = inlined_call_operand.vmem [shape: f32[1,8,128], index: 4, kind: output, shape index: {}]
  %s5 = sld [smem:[#allocation0]]
  $region26: #{residual_log_likelihood_loss.1} parent=0
    _
  %s7 = ssub.s32 1, %s5
  %s8 = scalar_select 0, %s7, %s5
  // Predicated region
  $region2: #{residual_log_likelihood_loss.1} parent=0 // pred_check
    _
  $region3: #{residual_log_likelihood_loss.1} parent=0 // pred_check_branch
    %10 = sbr.rel (0) target = $region5
  $region4: #{residual_log_likelihood_loss.1} parent=0 // pred_region
    _
  $region5: #{residual_log_likelihood_loss.1} parent=0 // pred_fallthru
    _
  // Predicated region
  $region6: #{residual_log_likelihood_loss.1} parent=0 // pred_check
    _
  $region7: #{residual_log_likelihood_loss.1} parent=0 // pred_check_branch
    %12 = sbr.rel (0) target = $region9
  $region8: #{residual_log_likelihood_loss.1} parent=0 // pred_region
    _
  $region9: #{residual_log_likelihood_loss.1} parent=0 // pred_fallthru
    _
  // Predicated region
  $region10: #{residual_log_likelihood_loss.1} parent=0 // pred_check
    _
  $region11: #{residual_log_likelihood_loss.1} parent=0 // pred_check_branch
    %14 = sbr.rel (0) target = $region13
  $region12: #{residual_log_likelihood_loss.1} parent=0 // pred_region
    _
  $region13: #{residual_log_likelihood_loss.1} parent=0 // pred_fallthru
    _
  // Predicated region
  $region14: #{residual_log_likelihood_loss.1} parent=0 // pred_check
    _
  $region15: #{residual_log_likelihood_loss.1} parent=0 // pred_check_branch
    %16 = sbr.rel (0) target = $region17
  $region16: #{residual_log_likelihood_loss.1} parent=0 // pred_region
    _
  $region17: #{residual_log_likelihood_loss.1} parent=0 // pred_fallthru
    _
  %v17 = vld [vmem:[%s0] sm:$0x1]
  %v18 = vld [vmem:[%s1] sm:$0x1]
  %v19 = vld [vmem:[%s2] sm:$0x1]
  %v20 = vsub.f32 %v17, %v18
  %v21 = vmul.f32 %v20, %v20
  %v22 = vld [vmem:[%s3] sm:$0xff]
  %v23 = vld [vmem:[%s3 + $0x8] sm:$0xff]
  %v24 = vld [vmem:[%s3 + $0x10] sm:$0xff]
  %v25 = vld [vmem:[%s3 + $0x18] sm:$0xff]
  %v26 = vld [vmem:[%s3 + $0x20] sm:$0xff]
  %v27 = vld [vmem:[%s3 + $0x28] sm:$0xff]
  %v28 = vld [vmem:[%s3 + $0x30] sm:$0xff]
  %v29 = vld [vmem:[%s3 + $0x38] sm:$0xff]
  %vm30 = vcmask 523264
  %v32 = vsel %vm30, %v21, 0
  %34 = vmatprep.subr.mxu0 0.0
  %v35 = vand.u32 %v22, 4294901760
  %36 = vmatpush1.msra.mxu0 %v35
  %37 = vmatprep.subr.mxu0 0.0
  %v38 = vand.u32 %v23, 4294901760
  %39 = vmatpush1.msra.mxu0 %v38
  %40 = vmatprep.subr.mxu0 0.0
  %v41 = vand.u32 %v24, 4294901760
  %42 = vmatpush1.msra.mxu0 %v41
  %43 = vmatprep.subr.mxu0 0.0
  %v44 = vand.u32 %v25, 4294901760
  %45 = vmatpush1.msra.mxu0 %v44
  %46 = vmatprep.subr.mxu0 0.0
  %v47 = vand.u32 %v26, 4294901760
  %48 = vmatpush1.msra.mxu0 %v47
  %49 = vmatprep.subr.mxu0 0.0
  %v50 = vand.u32 %v27, 4294901760
  %51 = vmatpush1.msra.mxu0 %v50
  %52 = vmatprep.subr.mxu0 0.0
  %v53 = vand.u32 %v28, 4294901760
  %54 = vmatpush1.msra.mxu0 %v53
  %55 = vmatprep.subr.mxu0 0.0
  %v56 = vand.u32 %v29, 4294901760
  %57 = vmatpush1.msra.mxu0 %v56
  %58 = vmatprep.subr.mxu0 0.0
  %59 = vmatpush1.msra.mxu0 0.0
  %60 = vmatprep.subr.mxu0 0.0
  %61 = vmatpush1.msra.mxu0 0.0
  %62 = vmatprep.subr.mxu0 0.0
  %63 = vmatpush1.msra.mxu0 0.0
  %64 = vmatprep.subr.mxu0 0.0
  %65 = vmatpush1.msra.mxu0 0.0
  %66 = vmatprep.subr.mxu0 0.0
  %67 = vmatpush1.msra.mxu0 0.0
  %68 = vmatprep.subr.mxu0 0.0
  %69 = vmatpush1.msra.mxu0 0.0
  %70 = vmatprep.subr.mxu0 0.0
  %71 = vmatpush1.msra.mxu0 0.0
  %72 = vmatprep.subr.mxu0 0.0
  %73 = vmatpush1.msra.mxu0 0.0
  %74 = vmatprep.subr.mxu0 0.0
  %75 = vmatpush1.msra.mxu0 0.0
  %76 = vmatprep.subr.mxu0 0.0
  %77 = vmatpush1.msra.mxu0 0.0
  %78 = vmatprep.subr.mxu0 0.0
  %79 = vmatpush1.msra.mxu0 0.0
  %80 = vmatprep.subr.mxu0 0.0
  %81 = vmatpush1.msra.mxu0 0.0
  %82 = vmatprep.subr.mxu0 0.0
  %83 = vmatpush1.msra.mxu0 0.0
  %84 = vmatprep.subr.mxu0 0.0
  %85 = vmatpush1.msra.mxu0 0.0
  %86 = vmatprep.subr.mxu0 0.0
  %87 = vmatpush1.msra.mxu0 0.0
  %88 = vmatprep.subr.mxu0 0.0
  %89 = vmatpush1.msra.mxu0 0.0
  %90 = vmatprep.subr.mxu0 0.0
  %91 = vmatpush1.msra.mxu0 0.0
  %92 = vmatprep.subr.mxu0 0.0
  %93 = vmatpush1.msra.mxu0 0.0
  %94 = vmatprep.subr.mxu0 0.0
  %95 = vmatpush1.msra.mxu0 0.0
  %96 = vmatprep.subr.mxu0 0.0
  %97 = vmatpush1.msra.mxu0 0.0
  %98 = vmatprep.subr.mxu0 0.0
  %99 = vmatpush1.msra.mxu0 0.0
  %100 = vmatprep.subr.mxu0 0.0
  %101 = vmatpush1.msra.mxu0 0.0
  %102 = vmatprep.subr.mxu0 0.0
  %103 = vmatpush1.msra.mxu0 0.0
  %104 = vmatprep.subr.mxu0 0.0
  %105 = vmatpush1.msra.mxu0 0.0
  %106 = vmatprep.mubr.f32.mxu0 0.0
  %v107 = vand.u32 %v32, 4294901760
  %v108 = vsub.f32 %v32, %v107
  %v109 = vand.u32 %v108, 4294901760
  %v110 = vsub.f32 %v108, %v109
  %v111 = vand.u32 %v110, 4294901760
  %112 = vmatmul.mubr.f32.gmra.mrb[0].mxu0 %v111
  %v113 = vpop.f32.mrb[0].mxu0
  %v114 = vadd.f32 0.0, %v113
  %v115 = vpop.f32.mrb[0].mxu0
  %116 = vdwg.mxu0
  %117 = vmatprep.subr.mxu0 0.0
  %v118 = vand.u32 %v22, 4294901760
  %v119 = vsub.f32 %v22, %v118
  %v120 = vand.u32 %v119, 4294901760
  %v121 = vsub.f32 %v119, %v120
  %v122 = vand.u32 %v121, 4294901760
  %123 = vmatpush1.msra.mxu0 %v122
  %124 = vmatprep.subr.mxu0 0.0
  %v125 = vand.u32 %v23, 4294901760
  %v126 = vsub.f32 %v23, %v125
  %v127 = vand.u32 %v126, 4294901760
  %v128 = vsub.f32 %v126, %v127
  %v129 = vand.u32 %v128, 4294901760
  %130 = vmatpush1.msra.mxu0 %v129
  %131 = vmatprep.subr.mxu0 0.0
  %v132 = vand.u32 %v24, 4294901760
  %v133 = vsub.f32 %v24, %v132
  %v134 = vand.u32 %v133, 4294901760
  %v135 = vsub.f32 %v133, %v134
  %v136 = vand.u32 %v135, 4294901760
  %137 = vmatpush1.msra.mxu0 %v136
  %138 = vmatprep.subr.mxu0 0.0
  %v139 = vand.u32 %v25, 4294901760
  %v140 = vsub.f32 %v25, %v139
  %v141 = vand.u32 %v140, 4294901760
  %v142 = vsub.f32 %v140, %v141
  %v143 = vand.u32 %v142, 4294901760
  %144 = vmatpush1.msra.mxu0 %v143
  %145 = vmatprep.subr.mxu0 0.0
  %v146 = vand.u32 %v26, 4294901760
  %v147 = vsub.f32 %v26, %v146
  %v148 = vand.u32 %v147, 4294901760
  %v149 = vsub.f32 %v147, %v148
  %v150 = vand.u32 %v149, 4294901760
  %151 = vmatpush1.msra.mxu0 %v150
  %152 = vmatprep.subr.mxu0 0.0
  %v153 = vand.u32 %v27, 4294901760
  %v154 = vsub.f32 %v27, %v153
  %v155 = vand.u32 %v154, 4294901760
  %v156 = vsub.f32 %v154, %v155
  %v157 = vand.u32 %v156, 4294901760
  %158 = vmatpush1.msra.mxu0 %v157
  %159 = vmatprep.subr.mxu0 0.0
  %v160 = vand.u32 %v28, 4294901760
  %v161 = vsub.f32 %v28, %v160
  %v162 = vand.u32 %v161, 4294901760
  %v163 = vsub.f32 %v161, %v162
  %v164 = vand.u32 %v163, 4294901760
  %165 = vmatpush1.msra.mxu0 %v164
  %166 = vmatprep.subr.mxu0 0.0
  %v167 = vand.u32 %v29, 4294901760
  %v168 = vsub.f32 %v29, %v167
  %v169 = vand.u32 %v168, 4294901760
  %v170 = vsub.f32 %v168, %v169
  %v171 = vand.u32 %v170, 4294901760
  %172 = vmatpush1.msra.mxu0 %v171
  %173 = vmatprep.subr.mxu0 0.0
  %174 = vmatpush1.msra.mxu0 0.0
  %175 = vmatprep.subr.mxu0 0.0
  %176 = vmatpush1.msra.mxu0 0.0
  %177 = vmatprep.subr.mxu0 0.0
  %178 = vmatpush1.msra.mxu0 0.0
  %179 = vmatprep.subr.mxu0 0.0
  %180 = vmatpush1.msra.mxu0 0.0
  %181 = vmatprep.subr.mxu0 0.0
  %182 = vmatpush1.msra.mxu0 0.0
  %183 = vmatprep.subr.mxu0 0.0
  %184 = vmatpush1.msra.mxu0 0.0
  %185 = vmatprep.subr.mxu0 0.0
  %186 = vmatpush1.msra.mxu0 0.0
  %187 = vmatprep.subr.mxu0 0.0
  %188 = vmatpush1.msra.mxu0 0.0
  %189 = vmatprep.subr.mxu0 0.0
  %190 = vmatpush1.msra.mxu0 0.0
  %191 = vmatprep.subr.mxu0 0.0
  %192 = vmatpush1.msra.mxu0 0.0
  %193 = vmatprep.subr.mxu0 0.0
  %194 = vmatpush1.msra.mxu0 0.0
  %195 = vmatprep.subr.mxu0 0.0
  %196 = vmatpush1.msra.mxu0 0.0
  %197 = vmatprep.subr.mxu0 0.0
  %198 = vmatpush1.msra.mxu0 0.0
  %199 = vmatprep.subr.mxu0 0.0
  %200 = vmatpush1.msra.mxu0 0.0
  %201 = vmatprep.subr.mxu0 0.0
  %202 = vmatpush1.msra.mxu0 0.0
  %203 = vmatprep.subr.mxu0 0.0
  %204 = vmatpush1.msra.mxu0 0.0
  %205 = vmatprep.subr.mxu0 0.0
  %206 = vmatpush1.msra.mxu0 0.0
  %207 = vmatprep.subr.mxu0 0.0
  %208 = vmatpush1.msra.mxu0 0.0
  %209 = vmatprep.subr.mxu0 0.0
  %210 = vmatpush1.msra.mxu0 0.0
  %211 = vmatprep.subr.mxu0 0.0
  %212 = vmatpush1.msra.mxu0 0.0
  %213 = vmatprep.subr.mxu0 0.0
  %214 = vmatpush1.msra.mxu0 0.0
  %215 = vmatprep.subr.mxu0 0.0
  %216 = vmatpush1.msra.mxu0 0.0
  %217 = vmatprep.subr.mxu0 0.0
  %218 = vmatpush1.msra.mxu0 0.0
  %219 = vmatprep.subr.mxu0 0.0
  %220 = vmatpush1.msra.mxu0 0.0
  %221 = vmatprep.mubr.f32.mxu0 0.0
  %v222 = vand.u32 %v32, 4294901760
  %223 = vmatmul.mubr.f32.gmra.mrb[0].mxu0 %v222
  %v224 = vpop.f32.mrb[0].mxu0
  %v225 = vadd.f32 %v114, %v224
  %v226 = vpop.f32.mrb[0].mxu0
  %227 = vdwg.mxu0
  %228 = vmatprep.subr.mxu0 0.0
  %v229 = vand.u32 %v22, 4294901760
  %v230 = vsub.f32 %v22, %v229
  %231 = vmatpush1.msra.mxu0 %v230
  %232 = vmatprep.subr.mxu0 0.0
  %v233 = vand.u32 %v23, 4294901760
  %v234 = vsub.f32 %v23, %v233
  %235 = vmatpush1.msra.mxu0 %v234
  %236 = vmatprep.subr.mxu0 0.0
  %v237 = vand.u32 %v24, 4294901760
  %v238 = vsub.f32 %v24, %v237
  %239 = vmatpush1.msra.mxu0 %v238
  %240 = vmatprep.subr.mxu0 0.0
  %v241 = vand.u32 %v25, 4294901760
  %v242 = vsub.f32 %v25, %v241
  %243 = vmatpush1.msra.mxu0 %v242
  %244 = vmatprep.subr.mxu0 0.0
  %v245 = vand.u32 %v26, 4294901760
  %v246 = vsub.f32 %v26, %v245
  %247 = vmatpush1.msra.mxu0 %v246
  %248 = vmatprep.subr.mxu0 0.0
  %v249 = vand.u32 %v27, 4294901760
  %v250 = vsub.f32 %v27, %v249
  %251 = vmatpush1.msra.mxu0 %v250
  %252 = vmatprep.subr.mxu0 0.0
  %v253 = vand.u32 %v28, 4294901760
  %v254 = vsub.f32 %v28, %v253
  %255 = vmatpush1.msra.mxu0 %v254
  %256 = vmatprep.subr.mxu0 0.0
  %v257 = vand.u32 %v29, 4294901760
  %v258 = vsub.f32 %v29, %v257
  %259 = vmatpush1.msra.mxu0 %v258
  %260 = vmatprep.subr.mxu0 0.0
  %261 = vmatpush1.msra.mxu0 0.0
  %262 = vmatprep.subr.mxu0 0.0
  %263 = vmatpush1.msra.mxu0 0.0
  %264 = vmatprep.subr.mxu0 0.0
  %265 = vmatpush1.msra.mxu0 0.0
  %266 = vmatprep.subr.mxu0 0.0
  %267 = vmatpush1.msra.mxu0 0.0
  %268 = vmatprep.subr.mxu0 0.0
  %269 = vmatpush1.msra.mxu0 0.0
  %270 = vmatprep.subr.mxu0 0.0
  %271 = vmatpush1.msra.mxu0 0.0
  %272 = vmatprep.subr.mxu0 0.0
  %273 = vmatpush1.msra.mxu0 0.0
  %274 = vmatprep.subr.mxu0 0.0
  %275 = vmatpush1.msra.mxu0 0.0
  %276 = vmatprep.subr.mxu0 0.0
  %277 = vmatpush1.msra.mxu0 0.0
  %278 = vmatprep.subr.mxu0 0.0
  %279 = vmatpush1.msra.mxu0 0.0
  %280 = vmatprep.subr.mxu0 0.0
  %281 = vmatpush1.msra.mxu0 0.0
  %282 = vmatprep.subr.mxu0 0.0
  %283 = vmatpush1.msra.mxu0 0.0
  %284 = vmatprep.subr.mxu0 0.0
  %285 = vmatpush1.msra.mxu0 0.0
  %286 = vmatprep.subr.mxu0 0.0
  %287 = vmatpush1.msra.mxu0 0.0
  %288 = vmatprep.subr.mxu0 0.0
  %289 = vmatpush1.msra.mxu0 0.0
  %290 = vmatprep.subr.mxu0 0.0
  %291 = vmatpush1.msra.mxu0 0.0
  %292 = vmatprep.subr.mxu0 0.0
  %293 = vmatpush1.msra.mxu0 0.0
  %294 = vmatprep.subr.mxu0 0.0
  %295 = vmatpush1.msra.mxu0 0.0
  %296 = vmatprep.subr.mxu0 0.0
  %297 = vmatpush1.msra.mxu0 0.0
  %298 = vmatprep.subr.mxu0 0.0
  %299 = vmatpush1.msra.mxu0 0.0
  %300 = vmatprep.subr.mxu0 0.0
  %301 = vmatpush1.msra.mxu0 0.0
  %302 = vmatprep.subr.mxu0 0.0
  %303 = vmatpush1.msra.mxu0 0.0
  %304 = vmatprep.subr.mxu0 0.0
  %305 = vmatpush1.msra.mxu0 0.0
  %306 = vmatprep.subr.mxu0 0.0
  %307 = vmatpush1.msra.mxu0 0.0
  %308 = vmatprep.mubr.f32.mxu0 0.0
  %v309 = vand.u32 %v32, 4294901760
  %v310 = vsub.f32 %v32, %v309
  %311 = vmatmul.mubr.f32.gmra.mrb[0].mxu0 %v310
  %v312 = vpop.f32.mrb[0].mxu0
  %v313 = vadd.f32 %v225, %v312
  %v314 = vpop.f32.mrb[0].mxu0
  %315 = vdwg.mxu0
  %316 = vmatprep.subr.mxu0 0.0
  %v317 = vand.u32 %v22, 4294901760
  %318 = vmatpush1.msra.mxu0 %v317
  %319 = vmatprep.subr.mxu0 0.0
  %v320 = vand.u32 %v23, 4294901760
  %321 = vmatpush1.msra.mxu0 %v320
  %322 = vmatprep.subr.mxu0 0.0
  %v323 = vand.u32 %v24, 4294901760
  %324 = vmatpush1.msra.mxu0 %v323
  %325 = vmatprep.subr.mxu0 0.0
  %v326 = vand.u32 %v25, 4294901760
  %327 = vmatpush1.msra.mxu0 %v326
  %328 = vmatprep.subr.mxu0 0.0
  %v329 = vand.u32 %v26, 4294901760
  %330 = vmatpush1.msra.mxu0 %v329
  %331 = vmatprep.subr.mxu0 0.0
  %v332 = vand.u32 %v27, 4294901760
  %333 = vmatpush1.msra.mxu0 %v332
  %334 = vmatprep.subr.mxu0 0.0
  %v335 = vand.u32 %v28, 4294901760
  %336 = vmatpush1.msra.mxu0 %v335
  %337 = vmatprep.subr.mxu0 0.0
  %v338 = vand.u32 %v29, 4294901760
  %339 = vmatpush1.msra.mxu0 %v338
  %340 = vmatprep.subr.mxu0 0.0
  %341 = vmatpush1.msra.mxu0 0.0
  %342 = vmatprep.subr.mxu0 0.0
  %343 = vmatpush1.msra.mxu0 0.0
  %344 = vmatprep.subr.mxu0 0.0
  %345 = vmatpush1.msra.mxu0 0.0
  %346 = vmatprep.subr.mxu0 0.0
  %347 = vmatpush1.msra.mxu0 0.0
  %348 = vmatprep.subr.mxu0 0.0
  %349 = vmatpush1.msra.mxu0 0.0
  %350 = vmatprep.subr.mxu0 0.0
  %351 = vmatpush1.msra.mxu0 0.0
  %352 = vmatprep.subr.mxu0 0.0
  %353 = vmatpush1.msra.mxu0 0.0
  %354 = vmatprep.subr.mxu0 0.0
  %355 = vmatpush1.msra.mxu0 0.0
  %356 = vmatprep.subr.mxu0 0.0
  %357 = vmatpush1.msra.mxu0 0.0
  %358 = vmatprep.subr.mxu0 0.0
  %359 = vmatpush1.msra.mxu0 0.0
  %360 = vmatprep.subr.mxu0 0.0
  %361 = vmatpush1.msra.mxu0 0.0
  %362 = vmatprep.subr.mxu0 0.0
  %363 = vmatpush1.msra.mxu0 0.0
  %364 = vmatprep.subr.mxu0 0.0
  %365 = vmatpush1.msra.mxu0 0.0
  %366 = vmatprep.subr.mxu0 0.0
  %367 = vmatpush1.msra.mxu0 0.0
  %368 = vmatprep.subr.mxu0 0.0
  %369 = vmatpush1.msra.mxu0 0.0
  %370 = vmatprep.subr.mxu0 0.0
  %371 = vmatpush1.msra.mxu0 0.0
  %372 = vmatprep.subr.mxu0 0.0
  %373 = vmatpush1.msra.mxu0 0.0
  %374 = vmatprep.subr.mxu0 0.0
  %375 = vmatpush1.msra.mxu0 0.0
  %376 = vmatprep.subr.mxu0 0.0
  %377 = vmatpush1.msra.mxu0 0.0
  %378 = vmatprep.subr.mxu0 0.0
  %379 = vmatpush1.msra.mxu0 0.0
  %380 = vmatprep.subr.mxu0 0.0
  %381 = vmatpush1.msra.mxu0 0.0
  %382 = vmatprep.subr.mxu0 0.0
  %383 = vmatpush1.msra.mxu0 0.0
  %384 = vmatprep.subr.mxu0 0.0
  %385 = vmatpush1.msra.mxu0 0.0
  %386 = vmatprep.subr.mxu0 0.0
  %387 = vmatpush1.msra.mxu0 0.0
  %388 = vmatprep.mubr.f32.mxu0 0.0
  %v389 = vand.u32 %v32, 4294901760
  %v390 = vsub.f32 %v32, %v389
  %v391 = vand.u32 %v390, 4294901760
  %392 = vmatmul.mubr.f32.gmra.mrb[0].mxu0 %v391
  %v393 = vpop.f32.mrb[0].mxu0
  %v394 = vadd.f32 %v313, %v393
  %v395 = vpop.f32.mrb[0].mxu0
  %396 = vdwg.mxu0
  %397 = vmatprep.subr.mxu0 0.0
  %v398 = vand.u32 %v22, 4294901760
  %v399 = vsub.f32 %v22, %v398
  %v400 = vand.u32 %v399, 4294901760
  %401 = vmatpush1.msra.mxu0 %v400
  %402 = vmatprep.subr.mxu0 0.0
  %v403 = vand.u32 %v23, 4294901760
  %v404 = vsub.f32 %v23, %v403
  %v405 = vand.u32 %v404, 4294901760
  %406 = vmatpush1.msra.mxu0 %v405
  %407 = vmatprep.subr.mxu0 0.0
  %v408 = vand.u32 %v24, 4294901760
  %v409 = vsub.f32 %v24, %v408
  %v410 = vand.u32 %v409, 4294901760
  %411 = vmatpush1.msra.mxu0 %v410
  %412 = vmatprep.subr.mxu0 0.0
  %v413 = vand.u32 %v25, 4294901760
  %v414 = vsub.f32 %v25, %v413
  %v415 = vand.u32 %v414, 4294901760
  %416 = vmatpush1.msra.mxu0 %v415
  %417 = vmatprep.subr.mxu0 0.0
  %v418 = vand.u32 %v26, 4294901760
  %v419 = vsub.f32 %v26, %v418
  %v420 = vand.u32 %v419, 4294901760
  %421 = vmatpush1.msra.mxu0 %v420
  %422 = vmatprep.subr.mxu0 0.0
  %v423 = vand.u32 %v27, 4294901760
  %v424 = vsub.f32 %v27, %v423
  %v425 = vand.u32 %v424, 4294901760
  %426 = vmatpush1.msra.mxu0 %v425
  %427 = vmatprep.subr.mxu0 0.0
  %v428 = vand.u32 %v28, 4294901760
  %v429 = vsub.f32 %v28, %v428
  %v430 = vand.u32 %v429, 4294901760
  %431 = vmatpush1.msra.mxu0 %v430
  %432 = vmatprep.subr.mxu0 0.0
  %v433 = vand.u32 %v29, 4294901760
  %v434 = vsub.f32 %v29, %v433
  %v435 = vand.u32 %v434, 4294901760
  %436 = vmatpush1.msra.mxu0 %v435
  %437 = vmatprep.subr.mxu0 0.0
  %438 = vmatpush1.msra.mxu0 0.0
  %439 = vmatprep.subr.mxu0 0.0
  %440 = vmatpush1.msra.mxu0 0.0
  %441 = vmatprep.subr.mxu0 0.0
  %442 = vmatpush1.msra.mxu0 0.0
  %443 = vmatprep.subr.mxu0 0.0
  %444 = vmatpush1.msra.mxu0 0.0
  %445 = vmatprep.subr.mxu0 0.0
  %446 = vmatpush1.msra.mxu0 0.0
  %447 = vmatprep.subr.mxu0 0.0
  %448 = vmatpush1.msra.mxu0 0.0
  %449 = vmatprep.subr.mxu0 0.0
  %450 = vmatpush1.msra.mxu0 0.0
  %451 = vmatprep.subr.mxu0 0.0
  %452 = vmatpush1.msra.mxu0 0.0
  %453 = vmatprep.subr.mxu0 0.0
  %454 = vmatpush1.msra.mxu0 0.0
  %455 = vmatprep.subr.mxu0 0.0
  %456 = vmatpush1.msra.mxu0 0.0
  %457 = vmatprep.subr.mxu0 0.0
  %458 = vmatpush1.msra.mxu0 0.0
  %459 = vmatprep.subr.mxu0 0.0
  %460 = vmatpush1.msra.mxu0 0.0
  %461 = vmatprep.subr.mxu0 0.0
  %462 = vmatpush1.msra.mxu0 0.0
  %463 = vmatprep.subr.mxu0 0.0
  %464 = vmatpush1.msra.mxu0 0.0
  %465 = vmatprep.subr.mxu0 0.0
  %466 = vmatpush1.msra.mxu0 0.0
  %467 = vmatprep.subr.mxu0 0.0
  %468 = vmatpush1.msra.mxu0 0.0
  %469 = vmatprep.subr.mxu0 0.0
  %470 = vmatpush1.msra.mxu0 0.0
  %471 = vmatprep.subr.mxu0 0.0
  %472 = vmatpush1.msra.mxu0 0.0
  %473 = vmatprep.subr.mxu0 0.0
  %474 = vmatpush1.msra.mxu0 0.0
  %475 = vmatprep.subr.mxu0 0.0
  %476 = vmatpush1.msra.mxu0 0.0
  %477 = vmatprep.subr.mxu0 0.0
  %478 = vmatpush1.msra.mxu0 0.0
  %479 = vmatprep.subr.mxu0 0.0
  %480 = vmatpush1.msra.mxu0 0.0
  %481 = vmatprep.subr.mxu0 0.0
  %482 = vmatpush1.msra.mxu0 0.0
  %483 = vmatprep.subr.mxu0 0.0
  %484 = vmatpush1.msra.mxu0 0.0
  %485 = vmatprep.mubr.f32.mxu0 0.0
  %v486 = vand.u32 %v32, 4294901760
  %487 = vmatmul.mubr.f32.gmra.mrb[0].mxu0 %v486
  %v488 = vpop.f32.mrb[0].mxu0
  %v489 = vadd.f32 %v394, %v488
  %v490 = vpop.f32.mrb[0].mxu0
  %491 = vdwg.mxu0
  %492 = vmatprep.subr.mxu0 0.0
  %v493 = vand.u32 %v22, 4294901760
  %494 = vmatpush1.msra.mxu0 %v493
  %495 = vmatprep.subr.mxu0 0.0
  %v496 = vand.u32 %v23, 4294901760
  %497 = vmatpush1.msra.mxu0 %v496
  %498 = vmatprep.subr.mxu0 0.0
  %v499 = vand.u32 %v24, 4294901760
  %500 = vmatpush1.msra.mxu0 %v499
  %501 = vmatprep.subr.mxu0 0.0
  %v502 = vand.u32 %v25, 4294901760
  %503 = vmatpush1.msra.mxu0 %v502
  %504 = vmatprep.subr.mxu0 0.0
  %v505 = vand.u32 %v26, 4294901760
  %506 = vmatpush1.msra.mxu0 %v505
  %507 = vmatprep.subr.mxu0 0.0
  %v508 = vand.u32 %v27, 4294901760
  %509 = vmatpush1.msra.mxu0 %v508
  %510 = vmatprep.subr.mxu0 0.0
  %v511 = vand.u32 %v28, 4294901760
  %512 = vmatpush1.msra.mxu0 %v511
  %513 = vmatprep.subr.mxu0 0.0
  %v514 = vand.u32 %v29, 4294901760
  %515 = vmatpush1.msra.mxu0 %v514
  %516 = vmatprep.subr.mxu0 0.0
  %517 = vmatpush1.msra.mxu0 0.0
  %518 = vmatprep.subr.mxu0 0.0
  %519 = vmatpush1.msra.mxu0 0.0
  %520 = vmatprep.subr.mxu0 0.0
  %521 = vmatpush1.msra.mxu0 0.0
  %522 = vmatprep.subr.mxu0 0.0
  %523 = vmatpush1.msra.mxu0 0.0
  %524 = vmatprep.subr.mxu0 0.0
  %525 = vmatpush1.msra.mxu0 0.0
  %526 = vmatprep.subr.mxu0 0.0
  %527 = vmatpush1.msra.mxu0 0.0
  %528 = vmatprep.subr.mxu0 0.0
  %529 = vmatpush1.msra.mxu0 0.0
  %530 = vmatprep.subr.mxu0 0.0
  %531 = vmatpush1.msra.mxu0 0.0
  %532 = vmatprep.subr.mxu0 0.0
  %533 = vmatpush1.msra.mxu0 0.0
  %534 = vmatprep.subr.mxu0 0.0
  %535 = vmatpush1.msra.mxu0 0.0
  %536 = vmatprep.subr.mxu0 0.0
  %537 = vmatpush1.msra.mxu0 0.0
  %538 = vmatprep.subr.mxu0 0.0
  %539 = vmatpush1.msra.mxu0 0.0
  %540 = vmatprep.subr.mxu0 0.0
  %541 = vmatpush1.msra.mxu0 0.0
  %542 = vmatprep.subr.mxu0 0.0
  %543 = vmatpush1.msra.mxu0 0.0
  %544 = vmatprep.subr.mxu0 0.0
  %545 = vmatpush1.msra.mxu0 0.0
  %546 = vmatprep.subr.mxu0 0.0
  %547 = vmatpush1.msra.mxu0 0.0
  %548 = vmatprep.subr.mxu0 0.0
  %549 = vmatpush1.msra.mxu0 0.0
  %550 = vmatprep.subr.mxu0 0.0
  %551 = vmatpush1.msra.mxu0 0.0
  %552 = vmatprep.subr.mxu0 0.0
  %553 = vmatpush1.msra.mxu0 0.0
  %554 = vmatprep.subr.mxu0 0.0
  %555 = vmatpush1.msra.mxu0 0.0
  %556 = vmatprep.subr.mxu0 0.0
  %557 = vmatpush1.msra.mxu0 0.0
  %558 = vmatprep.subr.mxu0 0.0
  %559 = vmatpush1.msra.mxu0 0.0
  %560 = vmatprep.subr.mxu0 0.0
  %561 = vmatpush1.msra.mxu0 0.0
  %562 = vmatprep.subr.mxu0 0.0
  %563 = vmatpush1.msra.mxu0 0.0
  %564 = vmatprep.mubr.f32.mxu0 0.0
  %v565 = vand.u32 %v32, 4294901760
  %566 = vmatmul.mubr.f32.gmra.mrb[0].mxu0 %v565
  %v567 = vpop.f32.mrb[0].mxu0
  %v568 = vadd.f32 %v489, %v567
  %v569 = vpop.f32.mrb[0].mxu0
  %570 = vdwg.mxu0
  %v571 = vrsqrt.pop %v568
  %v572 = vmul.f32 %v568, %v571
  %vm573 = vcmp.eq.f32.partialorder %v568, inf
  %v574 = vsel %vm573, %v568, %v572
  %vm575 = vcmp.eq.f32.partialorder %v568, 0.0
  %v576 = vand.u32 %v568, 2147483648
  %v577 = vsel %vm575, %v576, %v574
  %v578 = vadd.f32 %v19, 1e-06
  %v579 = vlog2.pop %v578
  %v580 = vmul.f32 %v579, 0.6931472
  %v581 = vrcp.pop %v578
  %v582 = vmul.f32 %v577, %v581
  %v583 = vadd.f32 %v580, %v582
  %vm584 = vcmask 253952
  %v585 = vsel %vm584, %v583, 0.0
  %586 = vadd.xlane.f32.xlu0 %v585
  %v587 = vpop.xlane.xlu0 %586
  %v588 = vrot.slane %v587, 4
  %v589 = vadd.f32 %v587, %v588
  %v590 = vrot.slane %v589, 2
  %v591 = vadd.f32 %v589, %v590
  %v592 = vrot.slane %v591, 1
  %v593 = vadd.f32 %v591, %v592
  %s594 = vtos %v593
  %v595 = vstv %s594
  %596 = vst [vmem:[%s4] sm:$0xff] %v595
  // Predicated region
  $region18: #{residual_log_likelihood_loss.1} parent=0 // pred_check
    _
  $region19: #{residual_log_likelihood_loss.1} parent=0 // pred_check_branch
    %598 = sbr.rel (0) target = $region21
  $region20: #{residual_log_likelihood_loss.1} parent=0 // pred_region
    _
  $region21: #{residual_log_likelihood_loss.1} parent=0 // pred_fallthru
    _
  // Predicated region
  $region22: #{residual_log_likelihood_loss.1} parent=0 // pred_check
    _
  $region23: #{residual_log_likelihood_loss.1} parent=0 // pred_check_branch
    %600 = sbr.rel (0) target = $region25
  $region24: #{residual_log_likelihood_loss.1} parent=0 // pred_region
    _
  $region25: #{residual_log_likelihood_loss.1} parent=0 // pred_fallthru
    _

</llo_original>
